<compile_context>
chip_gen: v7x
topology: tpu7x:2x2x1
jax: 0.10.0
libtpu: 0.0.40
codegen_flags: <defaults>
</compile_context>

<pallas_src>
import functools

import jax
import jax.numpy as jnp
from jax.experimental import pallas as pl
from jax.experimental.pallas import tpu as pltpu

EPSILON = 1e-07


def _vmem_budgets():
    """Returns (per-pipeline-buffer byte budget, vmem_limit_bytes), per TPU generation."""
    try:
        vmem = int(getattr(pltpu.get_tpu_info(), "vmem_capacity_bytes", 0))
    except Exception:
        vmem = 0
    if vmem >= 128 * 1024 * 1024:                    # v5e / v6e: 128 MiB physical VMEM
        return 8 * 1024 * 1024, 64 * 1024 * 1024
    return 4 * 1024 * 1024, 32 * 1024 * 1024         # v7x (64 MiB) / unknown: conservative


def _choose_rows_per_block(n_rows, n_classes, dtype):
    """Rows (b*h pairs) per grid step; divides n_rows whenever possible (no padding)."""
    itemsize = jnp.dtype(dtype).itemsize
    row_multiple = 16 if itemsize < 4 else 8         # min sublane tile for the dtype
    budget, _ = _vmem_budgets()
    r_cap = max(1, budget // (n_classes * itemsize))
    r_cap = min(r_cap, 512)
    if r_cap >= n_rows:
        return n_rows                                # single block (block dim == full dim)
    best = 0
    r = row_multiple
    while r <= r_cap:
        if n_rows % r == 0:
            best = r
        r += row_multiple
    if best:
        return best
    # rare fallback (n_rows has no suitable divisor): rows get zero-padded in the wrapper
    return max(row_multiple, (r_cap // row_multiple) * row_multiple)


def _sparse_mlcce_kernel(yp_ref, ypos_ref, loss_ref):
    """yp_ref:   VMEM (R, C)  logits block (f32 or bf16, upcast here)
       ypos_ref: VMEM (R, P)  gathered positive logits (f32)
       loss_ref: VMEM (R, 1)  per-row loss."""
    yp = yp_ref[...].astype(jnp.float32)
    y_pos = ypos_ref[...].astype(jnp.float32)

    # ---- all_loss = logsumexp([y_pred_row, 0]) over the full class dim (streaming pass) ----
    m = jnp.maximum(jnp.max(yp, axis=-1, keepdims=True), 0.0)            # (R, 1)
    s = jnp.sum(jnp.exp(yp - m), axis=-1, keepdims=True) + jnp.exp(-m)   # exp(0 - m) term
    all_loss = m + jnp.log(s)

    # ---- pos_loss = logsumexp([-y_pos, 0]) ----
    neg = -y_pos
    m2 = jnp.maximum(jnp.max(neg, axis=-1, keepdims=True), 0.0)
    s2 = jnp.sum(jnp.exp(neg - m2), axis=-1, keepdims=True) + jnp.exp(-m2)
    pos_loss = m2 + jnp.log(s2)

    # ---- lse_pos = logsumexp(y_pos) ----
    m3 = jnp.max(y_pos, axis=-1, keepdims=True)
    s3 = jnp.sum(jnp.exp(y_pos - m3), axis=-1, keepdims=True)
    lse_pos = m3 + jnp.log(s3)

    # ---- neg_loss = all_loss + log(clamp(1 - exp(lse_pos - all_loss), eps, 1)) ----
    aux = jnp.clip(1.0 - jnp.exp(lse_pos - all_loss), EPSILON, 1.0)
    neg_loss = all_loss + jnp.log(aux)

    loss_ref[...] = (pos_loss + neg_loss).astype(loss_ref.dtype)         # (R, 1) store


def sparse_mlcce_loss(y_pred, y_true_flat):
    """y_pred: [B, H, S, S]; y_true_flat: [B, H, P] int indices into the flattened [0, S*S]
    class dim (index == S*S refers to the appended zero logit, matching the PyTorch cat).
    Returns scalar mean_b( sum_h( loss[b, h] ) )."""
    B, H, S1, S2 = y_pred.shape
    C = S1 * S2
    P = y_true_flat.shape[-1]
    N = B * H

    yp = y_pred.reshape(N, C)                                  # contiguous reshape, no copy
    if yp.dtype not in (jnp.float32, jnp.bfloat16):
        yp = yp.astype(jnp.float32)
    yt = y_true_flat.reshape(N, P).astype(jnp.int32)

    # Positive-logit gather in plain XLA (tiny: N*P scalars).  Clamp indices so nothing
    # can read out of bounds; index == C selects the appended zero logit (spec semantics).
    safe_idx = jnp.clip(yt, 0, C - 1)
    y_pos = jnp.take_along_axis(yp, safe_idx, axis=-1)
    y_pos = jnp.where(yt == C, 0.0, y_pos).astype(jnp.float32)

    R = _choose_rows_per_block(N, C, yp.dtype)
    if N % R != 0:                                             # rare fallback path only
        Np = -(-N // R) * R
        yp = jnp.pad(yp, ((0, Np - N), (0, 0)))
        y_pos = jnp.pad(y_pos, ((0, Np - N), (0, 0)))
    else:
        Np = N
    G = Np // R

    itemsize = jnp.dtype(yp.dtype).itemsize
    _, vmem_limit = _vmem_budgets()
    cost = pl.CostEstimate(
        flops=int(4 * Np * C + 16 * Np * P),
        transcendentals=int(Np * C + 2 * Np * P + 4 * Np),
        bytes_accessed=int(Np * C * itemsize + 4 * Np * P + 4 * Np),
    )

    out = pl.pallas_call(
        _sparse_mlcce_kernel,
        out_shape=jax.ShapeDtypeStruct((Np, 1), jnp.float32),
        grid=(G,),
        in_specs=[
            pl.BlockSpec((R, C), lambda i: (i, 0)),            # logits: full class dim per block
            pl.BlockSpec((R, P), lambda i: (i, 0)),            # gathered positives
        ],
        out_specs=pl.BlockSpec((R, 1), lambda i: (i, 0)),
        compiler_params=pltpu.CompilerParams(
            dimension_semantics=("parallel",),
            vmem_limit_bytes=vmem_limit,
        ),
        cost_estimate=cost,
    )(yp, y_pos)

    loss = out.reshape(Np)[:N].reshape(B, H)
    return jnp.mean(jnp.sum(loss, axis=1))


def my_loss_re(y_preds, y_trues):
    """y_preds: list of 3 arrays [B, H, S, S]; y_trues: list of 3 arrays [B, H, P, 2]."""
    loss_list = []
    for y_pred, y_true in zip(y_preds, y_trues):
        S = y_pred.shape[2]
        flat_idx = y_true[..., 0] * S + y_true[..., 1]          # index glue (plain JAX)
        loss_list.append(sparse_mlcce_loss(y_pred, flat_idx))
    total = sum(loss_list) / 3
    return (total, loss_list[0], loss_list[1], loss_list[2])


# ---------------------------- pure-JAX reference ----------------------------
def _ref_loss(y_pred, y_true_flat, eps=EPSILON):
    B, H, S1, S2 = y_pred.shape
    yp = y_pred.reshape(B, H, S1 * S2)
    zeros = jnp.zeros_like(yp[..., :1])
    yp = jnp.concatenate([yp, zeros], axis=-1)
    y_pos_2 = jnp.take_along_axis(yp, y_true_flat, axis=-1)
    y_pos_1 = jnp.concatenate([y_pos_2, zeros], axis=-1)
    pos_loss = jax.nn.logsumexp(-y_pos_1, axis=-1)
    all_loss = jax.nn.logsumexp(yp, axis=-1)
    aux = jax.nn.logsumexp(y_pos_2, axis=-1) - all_loss
    aux = jnp.clip(1.0 - jnp.exp(aux), eps, 1.0)
    neg_loss = all_loss + jnp.log(aux)
    loss = pos_loss + neg_loss
    return jnp.mean(jnp.sum(loss, axis=1))


if __name__ == "__main__":
    B, H, S, P = 2, 4, 16, 8

    key = jax.random.PRNGKey(0)
    y_preds, y_trues = [], []
    for _ in range(3):
        key, k1, k2 = jax.random.split(key, 3)
        y_preds.append(jax.random.normal(k1, (B, H, S, S), dtype=jnp.float32))
        y_trues.append(jax.random.randint(k2, (B, H, P, 2), 0, S, dtype=jnp.int32))

    out = my_loss_re(y_preds, y_trues)
    out = jax.block_until_ready(out)

    # correctness check against the pure-JAX reference of the PyTorch semantics
    ref_list = [_ref_loss(yp, yt[..., 0] * S + yt[..., 1])
                for yp, yt in zip(y_preds, y_trues)]
    ref = (sum(ref_list) / 3, ref_list[0], ref_list[1], ref_list[2])
    for a, b in zip(out, ref):
        assert abs(float(a) - float(b)) < 1e-4, (float(a), float(b))

    print("KERNEL_OK")
</pallas_src>

<mosaic_0001>
module attributes {stable_mosaic.version = 11 : i64} {
  func.func @_sparse_mlcce_kernel(%arg0: i32, %arg1: memref<8x256xf32, #tpu.memory_space<vmem>>, %arg2: memref<8x8xf32, #tpu.memory_space<vmem>>, %arg3: memref<8x1xf32, #tpu.memory_space<vmem>>) attributes {dimension_semantics = [#tpu.dimension_semantics<parallel>], iteration_bounds = array<i64: 1>, scalar_prefetch = 0 : i64, scratch_operands = 0 : i64, tpu.core_type = #tpu.core_type<tc>, window_params = [{transform_indices = @transform_0, window_bounds = array<i64: 8, 256>}, {transform_indices = @transform_1, window_bounds = array<i64: 8, 8>}, {transform_indices = @transform_2, window_bounds = array<i64: 8, 1>}]} {
    %c0 = arith.constant 0 : index
    %c0_0 = arith.constant 0 : index
    %0 = vector.load %arg1[%c0, %c0_0] : memref<8x256xf32, #tpu.memory_space<vmem>>, vector<8x256xf32>
    %c0_1 = arith.constant 0 : index
    %c0_2 = arith.constant 0 : index
    %1 = vector.load %arg2[%c0_1, %c0_2] : memref<8x8xf32, #tpu.memory_space<vmem>>, vector<8x8xf32>
    %cst = arith.constant dense<0xFF800000> : vector<8xf32>
    %2 = vector.multi_reduction <maximumf>, %0, %cst [1] : vector<8x256xf32> to vector<8xf32>
    %3 = vector.shape_cast %2 : vector<8xf32> to vector<8x1xf32>
    %cst_3 = arith.constant 0.000000e+00 : f32
    %4 = vector.broadcast %cst_3 : f32 to vector<8x1xf32>
    %5 = arith.maximumf %3, %4 : vector<8x1xf32>
    %6 = vector.broadcast %5 : vector<8x1xf32> to vector<8x256xf32>
    %7 = arith.subf %0, %6 : vector<8x256xf32>
    %8 = math.exp %7 : vector<8x256xf32>
    %cst_4 = arith.constant dense<0.000000e+00> : vector<8xf32>
    %9 = vector.multi_reduction <add>, %8, %cst_4 [1] : vector<8x256xf32> to vector<8xf32>
    %10 = vector.shape_cast %9 : vector<8xf32> to vector<8x1xf32>
    %cst_5 = arith.constant 0.000000e+00 : f32
    %11 = vector.broadcast %cst_5 : f32 to vector<8x1xf32>
    %12 = arith.subf %11, %5 : vector<8x1xf32>
    %13 = math.exp %12 : vector<8x1xf32>
    %14 = arith.addf %10, %13 : vector<8x1xf32>
    %15 = math.log %14 : vector<8x1xf32>
    %16 = arith.addf %5, %15 : vector<8x1xf32>
    %cst_6 = arith.constant 0.000000e+00 : f32
    %17 = vector.broadcast %cst_6 : f32 to vector<8x8xf32>
    %18 = arith.subf %17, %1 : vector<8x8xf32>
    %cst_7 = arith.constant dense<0xFF800000> : vector<8xf32>
    %19 = vector.multi_reduction <maximumf>, %18, %cst_7 [1] : vector<8x8xf32> to vector<8xf32>
    %20 = vector.shape_cast %19 : vector<8xf32> to vector<8x1xf32>
    %cst_8 = arith.constant 0.000000e+00 : f32
    %21 = vector.broadcast %cst_8 : f32 to vector<8x1xf32>
    %22 = arith.maximumf %20, %21 : vector<8x1xf32>
    %23 = vector.broadcast %22 : vector<8x1xf32> to vector<8x8xf32>
    %24 = arith.subf %18, %23 : vector<8x8xf32>
    %25 = math.exp %24 : vector<8x8xf32>
    %cst_9 = arith.constant dense<0.000000e+00> : vector<8xf32>
    %26 = vector.multi_reduction <add>, %25, %cst_9 [1] : vector<8x8xf32> to vector<8xf32>
    %27 = vector.shape_cast %26 : vector<8xf32> to vector<8x1xf32>
    %cst_10 = arith.constant 0.000000e+00 : f32
    %28 = vector.broadcast %cst_10 : f32 to vector<8x1xf32>
    %29 = arith.subf %28, %22 : vector<8x1xf32>
    %30 = math.exp %29 : vector<8x1xf32>
    %31 = arith.addf %27, %30 : vector<8x1xf32>
    %32 = math.log %31 : vector<8x1xf32>
    %33 = arith.addf %22, %32 : vector<8x1xf32>
    %cst_11 = arith.constant dense<0xFF800000> : vector<8xf32>
    %34 = vector.multi_reduction <maximumf>, %1, %cst_11 [1] : vector<8x8xf32> to vector<8xf32>
    %35 = vector.shape_cast %34 : vector<8xf32> to vector<8x1xf32>
    %36 = vector.broadcast %35 : vector<8x1xf32> to vector<8x8xf32>
    %37 = arith.subf %1, %36 : vector<8x8xf32>
    %38 = math.exp %37 : vector<8x8xf32>
    %cst_12 = arith.constant dense<0.000000e+00> : vector<8xf32>
    %39 = vector.multi_reduction <add>, %38, %cst_12 [1] : vector<8x8xf32> to vector<8xf32>
    %40 = vector.shape_cast %39 : vector<8xf32> to vector<8x1xf32>
    %41 = math.log %40 : vector<8x1xf32>
    %42 = arith.addf %35, %41 : vector<8x1xf32>
    %43 = arith.subf %42, %16 : vector<8x1xf32>
    %44 = math.exp %43 : vector<8x1xf32>
    %cst_13 = arith.constant 1.000000e+00 : f32
    %45 = vector.broadcast %cst_13 : f32 to vector<8x1xf32>
    %46 = arith.subf %45, %44 : vector<8x1xf32>
    %cst_14 = arith.constant 1.000000e-07 : f32
    %cst_15 = arith.constant 1.000000e+00 : f32
    %47 = vector.broadcast %cst_14 : f32 to vector<8x1xf32>
    %48 = arith.maximumf %47, %46 : vector<8x1xf32>
    %49 = vector.broadcast %cst_15 : f32 to vector<8x1xf32>
    %50 = arith.minimumf %49, %48 : vector<8x1xf32>
    %51 = math.log %50 : vector<8x1xf32>
    %52 = arith.addf %16, %51 : vector<8x1xf32>
    %53 = arith.addf %33, %52 : vector<8x1xf32>
    %c0_16 = arith.constant 0 : index
    %c0_17 = arith.constant 0 : index
    %54 = vector.load %arg3[%c0_16, %c0_17] : memref<8x1xf32, #tpu.memory_space<vmem>>, vector<8x1xf32>
    tpu.vector_store %arg3[%c0_16, %c0_17], %53 {strides = array<i32>} : memref<8x1xf32, #tpu.memory_space<vmem>>, vector<8x1xf32>,
    return
  }
  func.func @transform_0(%arg0: i32) -> (i32, i32) {
    %c0_i32 = arith.constant 0 : i32
    %c0_i32_0 = arith.constant 0 : i32
    return %arg0, %c0_i32 : i32, i32
  }
  func.func @transform_1(%arg0: i32) -> (i32, i32) {
    %c0_i32 = arith.constant 0 : i32
    %c0_i32_0 = arith.constant 0 : i32
    return %arg0, %c0_i32 : i32, i32
  }
  func.func @transform_2(%arg0: i32) -> (i32, i32) {
    %c0_i32 = arith.constant 0 : i32
    %c0_i32_0 = arith.constant 0 : i32
    return %arg0, %c0_i32 : i32, i32
  }
}

</mosaic_0001>

<llo_original>
// kernel: tpu_custom_call.1
$region0: #{tpu_custom_call.1}
  #allocation0 [shape = 'u32[]', space=smem, size = 0x4, offset = 0x4, fixed_abs, tag = 'smem constant byte address 0x4 - core index']
  #allocation1 [shape = 'u32[144,128]{1,0:T(1,128)}', space=vmem, size = 0x12000, scoped, tag = 'internal scratch']
  %s0 = inlined_call_operand.hbm [shape: f32[8,256], index: 0, kind: input, shape index: {}]
  %s1 = inlined_call_operand.hbm [shape: f32[8,8], index: 1, kind: input, shape index: {}]
  %s2 = inlined_call_operand.vmem [shape: f32[8,1], index: 2, kind: output, shape index: {}]
  %s3 = sld [smem:[#allocation0]]
  $region26: #{tpu_custom_call.1} parent=0
    _
  %s5 = ssub.s32 1, %s3
  %s6 = scalar_select 0, %s5, %s3
  $region1: #{tpu_custom_call.1} parent=0
    #allocation2 [shape = 'u8[8192]{0}', space=vmem, size = 0x2000, scoped, tag = 'input window, operand 0, single buffered']
    #allocation3 [shape = 's32[1]{0}', space=sflag, size = 0x4, scoped, tag = 'scoped memory for tpu_custom_call.1']
    #allocation4 [shape = 'u8[4096]{0}', space=vmem, size = 0x1000, scoped, tag = 'input window, operand 1, single buffered']
    #allocation5 [shape = 's32[1]{0}', space=sflag, size = 0x4, scoped, tag = 'scoped memory for tpu_custom_call.1']
    %7 = vsyncpa [#allocation3], 0
    %8 = vsyncpa [#allocation5], 0
    // Predicated region
    $region2: #{tpu_custom_call.1} parent=1 // pred_check
      _
    $region3: #{tpu_custom_call.1} parent=1 // pred_check_branch
      %10 = sbr.rel (0) target = $region5
    $region4: #{tpu_custom_call.1} parent=1 // pred_region
      %s12 = ssub.s32 256, 256
      %13 = vsyncadd [#allocation3], %s12
      %s15 = sshll.u32 [#allocation2], 4
      %s16 = int_to_ptr.vmem [resolvable:$true] %s15
      %18 = dma.hbm_to_vmem [thread:$0]  %s0, 256, %s16, [#allocation3]
    $region5: #{tpu_custom_call.1} parent=1 // pred_fallthru
      _
    // Predicated region
    $region6: #{tpu_custom_call.1} parent=1 // pred_check
      _
    $region7: #{tpu_custom_call.1} parent=1 // pred_check_branch
      %20 = sbr.rel (0) target = $region9
    $region8: #{tpu_custom_call.1} parent=1 // pred_region
      %s22 = ssub.s32 128, 128
      %23 = vsyncadd [#allocation5], %s22
      %s25 = sshll.u32 [#allocation4], 4
      %s26 = int_to_ptr.vmem [resolvable:$true] %s25
      %28 = dma.hbm_to_vmem [thread:$0]  %s1, 128, %s26, [#allocation5]
    $region9: #{tpu_custom_call.1} parent=1 // pred_fallthru
      _
    // Predicated region
    $region10: #{tpu_custom_call.1} parent=1 // pred_check
      _
    $region11: #{tpu_custom_call.1} parent=1 // pred_check_branch
      %30 = sbr.rel (0) target = $region13
    $region12: #{tpu_custom_call.1} parent=1 // pred_region
      %31 = dma.done [#allocation3], 256
    $region13: #{tpu_custom_call.1} parent=1 // pred_fallthru
      _
    // Predicated region
    $region14: #{tpu_custom_call.1} parent=1 // pred_check
      _
    $region15: #{tpu_custom_call.1} parent=1 // pred_check_branch
      %33 = sbr.rel (0) target = $region17
    $region16: #{tpu_custom_call.1} parent=1 // pred_region
      %34 = dma.done [#allocation5], 128
    $region17: #{tpu_custom_call.1} parent=1 // pred_fallthru
      _
    %v35 = vld [vmem:[#allocation2] sm:$0xff]
    %v36 = vld [vmem:[#allocation2 + $0x8] sm:$0xff]
    %v37 = vld [vmem:[#allocation4] sm:$0xff]
    %v38 = vmax.f32 %v35, %v36
    %39 = vmax.xlane.f32.xlu0 %v38
    %v40 = vpop.xlane.xlu0 %39
    %v41 = vmax.f32 %v40, 0.0
    %v42 = vsub.f32 %v35, %v41
    %v43 = vsub.f32 %v36, %v41
    %v44 = vmul.f32 %v42, 1.442695
    %v45 = vpow.pop %v44
    %v46 = vmul.f32 %v43, 1.442695
    %v47 = vpow.pop %v46
    %v48 = vadd.f32 %v45, %v47
    %49 = vadd.xlane.f32.xlu0 %v48
    %v50 = vpop.xlane.xlu0 %49
    %v51 = vsub.f32 0.0, %v41
    %v52 = vmul.f32 %v51, 1.442695
    %v53 = vpow.pop %v52
    %v54 = vadd.f32 %v50, %v53
    %v55 = vlog2.pop %v54
    %v56 = vmul.f32 %v55, 0.6931472
    %v57 = vadd.f32 %v41, %v56
    %v58 = vsub.f32 0.0, %v37
    %vm59 = vcmask 64512
    %v60 = vsel %vm59, %v58, -inf
    %61 = vmax.xlane.f32.xlu0 %v60
    %v62 = vpop.xlane.xlu0 %61
    %v63 = vmax.f32 %v62, 0.0
    %v64 = vsub.f32 %v58, %v63
    %v65 = vmul.f32 %v64, 1.442695
    %v66 = vpow.pop %v65
    %v67 = vsel %vm59, %v66, 0.0
    %68 = vadd.xlane.f32.xlu0 %v67
    %v69 = vpop.xlane.xlu0 %68
    %v70 = vsub.f32 0.0, %v63
    %v71 = vmul.f32 %v70, 1.442695
    %v72 = vpow.pop %v71
    %v73 = vadd.f32 %v69, %v72
    %v74 = vlog2.pop %v73
    %v75 = vmul.f32 %v74, 0.6931472
    %v76 = vadd.f32 %v63, %v75
    %v77 = vsel %vm59, %v37, -inf
    %78 = vmax.xlane.f32.xlu0 %v77
    %v79 = vpop.xlane.xlu0 %78
    %v80 = vsub.f32 %v37, %v79
    %v81 = vmul.f32 %v80, 1.442695
    %v82 = vpow.pop %v81
    %v83 = vsel %vm59, %v82, 0.0
    %84 = vadd.xlane.f32.xlu0 %v83
    %v85 = vpop.xlane.xlu0 %84
    %v86 = vlog2.pop %v85
    %v87 = vmul.f32 %v86, 0.6931472
    %v88 = vadd.f32 %v79, %v87
    %v89 = vsub.f32 %v88, %v57
    %v90 = vmul.f32 %v89, 1.442695
    %v91 = vpow.pop %v90
    %v92 = vsub.f32 1.0, %v91
    %v93 = vmax.f32 %v92, 1e-07
    %v94 = vmin.f32 %v93, 1.0
    %v95 = vlog2.pop %v94
    %v96 = vmul.f32 %v95, 0.6931472
    %v97 = vadd.f32 %v57, %v96
    %v98 = vadd.f32 %v76, %v97
    %vm99 = vcmask 7168
    %100 = vst.msk [vmem:[%s2] sm:$0xff] %vm99, %v98
    // Predicated region
    $region18: #{tpu_custom_call.1} parent=1 // pred_check
      _
    $region19: #{tpu_custom_call.1} parent=1 // pred_check_branch
      %102 = sbr.rel (0) target = $region21
    $region20: #{tpu_custom_call.1} parent=1 // pred_region
      _
    $region21: #{tpu_custom_call.1} parent=1 // pred_fallthru
      _
    // Predicated region
    $region22: #{tpu_custom_call.1} parent=1 // pred_check
      _
    $region23: #{tpu_custom_call.1} parent=1 // pred_check_branch
      %104 = sbr.rel (0) target = $region25
    $region24: #{tpu_custom_call.1} parent=1 // pred_region
      _
    $region25: #{tpu_custom_call.1} parent=1 // pred_fallthru
      _
    %105 = vsyncpa [#allocation3], 1
    %106 = vsyncpa [#allocation5], 1

</llo_original>
